<compile_context>
chip_gen: v7x
topology: tpu7x:2x2x1
jax: 0.10.0
libtpu: 0.0.40
codegen_flags: <defaults>
</compile_context>

<pallas_src>
import jax
import jax.numpy as jnp
from jax.experimental import pallas as pl
from jax.experimental.pallas import tpu as pltpu


def _gn_kernel(eps, inv_count, valid_count, pad):
    def kernel(x_ref, gamma_ref, beta_ref, o_ref):
        # x_ref:     (Nb, Gb, R, L)   Nb batches x Gb groups
        # gamma_ref: (Gb, R, Lp)      per-row (Lp=1) or per-element (Lp=L) scale
        # beta_ref:  (Gb, R, Lp)      per-row / per-element shift
        x = x_ref[...].astype(jnp.float32)

        # Pass 1 (in VMEM): mean per (batch, group).
        s = jnp.sum(x, axis=-1, keepdims=True)       # (Nb, Gb, R, 1)
        s = jnp.sum(s, axis=-2, keepdims=True)       # (Nb, Gb, 1, 1)
        mean = s * inv_count

        # Pass 2 (in VMEM): centered variance (numerically stable form).
        xc = x - mean
        if pad:
            R, L = x.shape[-2], x.shape[-1]
            flat = (jax.lax.broadcasted_iota(jnp.int32, (R, L), 0) * L
                    + jax.lax.broadcasted_iota(jnp.int32, (R, L), 1))
            xc = jnp.where(flat < valid_count, xc, 0.0)
        ss = jnp.sum(xc * xc, axis=-1, keepdims=True)
        ss = jnp.sum(ss, axis=-2, keepdims=True)
        var = ss * inv_count
        inv = jax.lax.rsqrt(var + eps)

        gamma = gamma_ref[...][None]                 # (1, Gb, R, Lp)
        beta = beta_ref[...][None]                   # (1, Gb, R, Lp)
        scale = gamma * inv                          # (Nb, Gb, R, Lp)

        o_ref[...] = (xc * scale + beta).astype(o_ref.dtype)

    return kernel


def _next_smaller_divisor(cur, total):
    for d in range(cur - 1, 0, -1):
        if total % d == 0:
            return d
    return 1


def group_norm(x, gamma, beta, num_groups, eps=1e-5):
    """x: (N, C, H, W), gamma/beta: (C,). Returns (N, C, H, W)."""
    N, C, H, W = x.shape
    G = num_groups
    assert C % G == 0
    Cg = C // G
    HW = H * W
    total = Cg * HW
    f32 = jnp.float32

    # ---- Lane-dense flattening of each group's slab into (R, 128) rows. ----
    L = 128
    if HW % L == 0:
        rep = HW // L                    # rows per channel
        R = Cg * rep
        pad = 0
        param_L = 1                      # per-row affine (row within 1 channel)
        x4 = x.reshape(N, G, R, L)
        gamma_rows = jnp.repeat(
            gamma.astype(f32).reshape(G, Cg), rep, axis=1).reshape(G, R, 1)
        beta_rows = jnp.repeat(
            beta.astype(f32).reshape(G, Cg), rep, axis=1).reshape(G, R, 1)
    else:
        # Flatten each group slab and zero-pad to a multiple of 128 lanes so
        # stores stay unmasked; affine becomes per-element (rows may span
        # channel boundaries).  Padded tail is masked in-kernel & sliced off.
        R = pl.cdiv(total, L)
        pad = R * L - total
        param_L = L
        x3 = x.reshape(N, G, total)
        x3 = jnp.pad(x3, ((0, 0), (0, 0), (0, pad)))
        x4 = x3.reshape(N, G, R, L)
        g_el = jnp.repeat(gamma.astype(f32).reshape(G, Cg), HW, axis=1)
        b_el = jnp.repeat(beta.astype(f32).reshape(G, Cg), HW, axis=1)
        gamma_rows = jnp.pad(g_el, ((0, 0), (0, pad))).reshape(G, R, L)
        beta_rows = jnp.pad(b_el, ((0, 0), (0, pad))).reshape(G, R, L)

    # ---- Block sizing: ~4 MiB of x per grid step. ----
    itemsize = jnp.dtype(x.dtype).itemsize
    group_bytes = R * L * itemsize
    target_block_bytes = 4 << 20

    nb = max(1, min(N, target_block_bytes // max(group_bytes, 1)))
    while N % nb != 0:
        nb -= 1
    gb = 1
    if nb == N:
        # Whole batch fits but block is still small: pack groups too (makes
        # each per-batch DMA chunk gb*R*L contiguous in the (N,G,R,L) layout).
        gb = max(1, min(G, target_block_bytes // max(nb * group_bytes, 1)))
        while G % gb != 0:
            gb -= 1

    # ---- VMEM budget from the real pipelined footprint. ----
    try:
        info = pltpu.get_tpu_info()
        phys_vmem = int(getattr(info, "vmem_capacity_bytes", 64 << 20))
    except Exception:
        phys_vmem = 64 << 20             # assume most restrictive (v7x)
    vmem_cap = (phys_vmem * 3) // 4      # ~48 MiB on v7x, ~96 MiB on v5e/v6e

    def _footprint(nb_, gb_):
        blk = nb_ * gb_ * R * L
        io = 2 * blk * itemsize * 2                  # in + out, double-buffered
        tmps = 3 * blk * 4                           # f32 copy, centered, squared
        params = 2 * 2 * gb_ * R * param_L * 4       # gamma + beta, double-buffered
        return io + tmps + params

    # Shrink blocks until the pipelined footprint fits the budget.
    while _footprint(nb, gb) > vmem_cap and (nb > 1 or gb > 1):
        if gb > 1:
            gb = _next_smaller_divisor(gb, G)
        else:
            nb = _next_smaller_divisor(nb, N)
    # TODO(synk): if a single (batch, group) slab still exceeds the VMEM budget
    # (nb == gb == 1), add a trailing "arbitrary" R-tile axis with a sum/sumsq
    # accumulator pass followed by a normalize pass instead of one-shot blocks.

    # Megacore robustness (v7x): expose at least 2 grid steps to shard across
    # the two TensorCores when the whole problem would otherwise be one step.
    if (G // gb) * (N // nb) < 2:
        if gb > 1:
            gb = _next_smaller_divisor(gb, G)
        elif nb > 1:
            nb = _next_smaller_divisor(nb, N)

    vmem_limit = int(max(32 << 20, min(vmem_cap, int(_footprint(nb, gb) * 1.25))))

    inv_count = 1.0 / float(total)

    out = pl.pallas_call(
        _gn_kernel(float(eps), inv_count, total, pad),
        out_shape=jax.ShapeDtypeStruct((N, G, R, L), x.dtype),
        grid_spec=pltpu.PrefetchScalarGridSpec(
            num_scalar_prefetch=0,
            # Group axis outer: gamma/beta block indices are invariant over the
            # inner (batch-block) axis, so they are fetched only G/gb times.
            grid=(G // gb, N // nb),
            in_specs=[
                pl.BlockSpec((nb, gb, R, L), lambda g, n: (n, g, 0, 0)),
                pl.BlockSpec((gb, R, param_L), lambda g, n: (g, 0, 0)),
                pl.BlockSpec((gb, R, param_L), lambda g, n: (g, 0, 0)),
            ],
            out_specs=pl.BlockSpec((nb, gb, R, L), lambda g, n: (n, g, 0, 0)),
        ),
        compiler_params=pltpu.CompilerParams(
            dimension_semantics=("parallel", "parallel"),
            vmem_limit_bytes=vmem_limit,
        ),
    )(x4, gamma_rows, beta_rows)

    if pad:
        out = out.reshape(N, G, R * L)[:, :, :total]
    return out.reshape(N, C, H, W)


def group_norm_ref(x, gamma, beta, num_groups, eps=1e-5):
    N, C, H, W = x.shape
    G = num_groups
    xr = x.reshape(N, G, -1)
    mean = jnp.mean(xr, axis=-1, keepdims=True)
    var = jnp.mean((xr - mean) ** 2, axis=-1, keepdims=True)
    xn = ((xr - mean) / jnp.sqrt(var + eps)).reshape(N, C, H, W)
    return xn * gamma[None, :, None, None] + beta[None, :, None, None]


if __name__ == "__main__":
    # GN(num_groups=2, num_channels=4) on input x of shape (2, 4, 16, 16)
    num_groups = 2
    num_channels = 4
    N, H, W = 2, 16, 16

    key = jax.random.PRNGKey(0)
    kx, kg, kb = jax.random.split(key, 3)
    x = jax.random.normal(kx, (N, num_channels, H, W), dtype=jnp.float32)
    # nn.GroupNorm defaults are ones/zeros; use random values so the affine
    # path is actually exercised.
    gamma = jax.random.normal(kg, (num_channels,), dtype=jnp.float32)
    beta = jax.random.normal(kb, (num_channels,), dtype=jnp.float32)

    out = group_norm(x, gamma, beta, num_groups)
    out = jax.block_until_ready(out)

    ref = group_norm_ref(x, gamma, beta, num_groups)
    assert jnp.allclose(out, ref, rtol=1e-5, atol=1e-5), "mismatch vs reference"

    # Also exercise the lane-padding path (HW % 128 != 0) once, on a tiny shape.
    x2 = jax.random.normal(kx, (2, 4, 7, 7), dtype=jnp.float32)
    out2 = jax.block_until_ready(group_norm(x2, gamma, beta, num_groups))
    ref2 = group_norm_ref(x2, gamma, beta, num_groups)
    assert jnp.allclose(out2, ref2, rtol=1e-5, atol=1e-5), "mismatch (padded path)"

    print("KERNEL_OK")
</pallas_src>

<mosaic_0001>
module attributes {stable_mosaic.version = 11 : i64} {
  func.func @kernel(%arg0: i32, %arg1: i32, %arg2: memref<2x1x4x128xf32, #tpu.memory_space<vmem>>, %arg3: memref<1x4x1xf32, #tpu.memory_space<vmem>>, %arg4: memref<1x4x1xf32, #tpu.memory_space<vmem>>, %arg5: memref<2x1x4x128xf32, #tpu.memory_space<vmem>>) attributes {dimension_semantics = [#tpu.dimension_semantics<parallel>, #tpu.dimension_semantics<parallel>], iteration_bounds = array<i64: 2, 1>, scalar_prefetch = 0 : i64, scratch_operands = 0 : i64, tpu.core_type = #tpu.core_type<tc>, window_params = [{transform_indices = @transform_0, window_bounds = array<i64: 2, 1, 4, 128>}, {transform_indices = @transform_1, window_bounds = array<i64: 1, 4, 1>}, {transform_indices = @transform_2, window_bounds = array<i64: 1, 4, 1>}, {transform_indices = @transform_3, window_bounds = array<i64: 2, 1, 4, 128>}]} {
    %c0 = arith.constant 0 : index
    %c0_0 = arith.constant 0 : index
    %c0_1 = arith.constant 0 : index
    %c0_2 = arith.constant 0 : index
    %0 = vector.load %arg2[%c0, %c0_0, %c0_1, %c0_2] : memref<2x1x4x128xf32, #tpu.memory_space<vmem>>, vector<2x1x4x128xf32>
    %cst = arith.constant dense<0.000000e+00> : vector<2x1x4xf32>
    %1 = vector.multi_reduction <add>, %0, %cst [3] : vector<2x1x4x128xf32> to vector<2x1x4xf32>
    %2 = vector.shape_cast %1 : vector<2x1x4xf32> to vector<2x1x4x1xf32>
    %cst_3 = arith.constant dense<0.000000e+00> : vector<2x1x1xf32>
    %3 = vector.multi_reduction <add>, %2, %cst_3 [2] : vector<2x1x4x1xf32> to vector<2x1x1xf32>
    %4 = vector.shape_cast %3 : vector<2x1x1xf32> to vector<2x1x1x1xf32>
    %cst_4 = arith.constant 0.001953125 : f32
    %5 = vector.broadcast %cst_4 : f32 to vector<2x1x1x1xf32>
    %6 = arith.mulf %4, %5 : vector<2x1x1x1xf32>
    %7 = vector.broadcast %6 : vector<2x1x1x1xf32> to vector<2x1x4x128xf32>
    %8 = arith.subf %0, %7 : vector<2x1x4x128xf32>
    %9 = arith.mulf %8, %8 : vector<2x1x4x128xf32>
    %cst_5 = arith.constant dense<0.000000e+00> : vector<2x1x4xf32>
    %10 = vector.multi_reduction <add>, %9, %cst_5 [3] : vector<2x1x4x128xf32> to vector<2x1x4xf32>
    %11 = vector.shape_cast %10 : vector<2x1x4xf32> to vector<2x1x4x1xf32>
    %cst_6 = arith.constant dense<0.000000e+00> : vector<2x1x1xf32>
    %12 = vector.multi_reduction <add>, %11, %cst_6 [2] : vector<2x1x4x1xf32> to vector<2x1x1xf32>
    %13 = vector.shape_cast %12 : vector<2x1x1xf32> to vector<2x1x1x1xf32>
    %cst_7 = arith.constant 0.001953125 : f32
    %14 = vector.broadcast %cst_7 : f32 to vector<2x1x1x1xf32>
    %15 = arith.mulf %13, %14 : vector<2x1x1x1xf32>
    %cst_8 = arith.constant 9.99999974E-6 : f32
    %16 = vector.broadcast %cst_8 : f32 to vector<2x1x1x1xf32>
    %17 = arith.addf %15, %16 : vector<2x1x1x1xf32>
    %18 = math.rsqrt %17 : vector<2x1x1x1xf32>
    %c0_9 = arith.constant 0 : index
    %c0_10 = arith.constant 0 : index
    %c0_11 = arith.constant 0 : index
    %19 = vector.load %arg3[%c0_9, %c0_10, %c0_11] : memref<1x4x1xf32, #tpu.memory_space<vmem>>, vector<1x4x1xf32>
    %20 = vector.shape_cast %19 : vector<1x4x1xf32> to vector<1x1x4x1xf32>
    %c0_12 = arith.constant 0 : index
    %c0_13 = arith.constant 0 : index
    %c0_14 = arith.constant 0 : index
    %21 = vector.load %arg4[%c0_12, %c0_13, %c0_14] : memref<1x4x1xf32, #tpu.memory_space<vmem>>, vector<1x4x1xf32>
    %22 = vector.shape_cast %21 : vector<1x4x1xf32> to vector<1x1x4x1xf32>
    %23 = vector.broadcast %20 : vector<1x1x4x1xf32> to vector<2x1x4x1xf32>
    %24 = vector.broadcast %18 : vector<2x1x1x1xf32> to vector<2x1x4x1xf32>
    %25 = arith.mulf %23, %24 : vector<2x1x4x1xf32>
    %26 = vector.broadcast %25 : vector<2x1x4x1xf32> to vector<2x1x4x128xf32>
    %27 = arith.mulf %8, %26 : vector<2x1x4x128xf32>
    %28 = vector.broadcast %22 : vector<1x1x4x1xf32> to vector<2x1x4x128xf32>
    %29 = arith.addf %27, %28 : vector<2x1x4x128xf32>
    %c0_15 = arith.constant 0 : index
    %c0_16 = arith.constant 0 : index
    %c0_17 = arith.constant 0 : index
    %c0_18 = arith.constant 0 : index
    %30 = vector.load %arg5[%c0_15, %c0_16, %c0_17, %c0_18] : memref<2x1x4x128xf32, #tpu.memory_space<vmem>>, vector<2x1x4x128xf32>
    tpu.vector_store %arg5[%c0_15, %c0_16, %c0_17, %c0_18], %29 {strides = array<i32>} : memref<2x1x4x128xf32, #tpu.memory_space<vmem>>, vector<2x1x4x128xf32>,
    return
  }
  func.func @transform_0(%arg0: i32, %arg1: i32) -> (i32, i32, i32, i32) {
    %c0_i32 = arith.constant 0 : i32
    %c0_i32_0 = arith.constant 0 : i32
    %c0_i32_1 = arith.constant 0 : i32
    return %arg1, %arg0, %c0_i32, %c0_i32_0 : i32, i32, i32, i32
  }
  func.func @transform_1(%arg0: i32, %arg1: i32) -> (i32, i32, i32) {
    %c0_i32 = arith.constant 0 : i32
    %c0_i32_0 = arith.constant 0 : i32
    %c0_i32_1 = arith.constant 0 : i32
    return %arg0, %c0_i32, %c0_i32_0 : i32, i32, i32
  }
  func.func @transform_2(%arg0: i32, %arg1: i32) -> (i32, i32, i32) {
    %c0_i32 = arith.constant 0 : i32
    %c0_i32_0 = arith.constant 0 : i32
    %c0_i32_1 = arith.constant 0 : i32
    return %arg0, %c0_i32, %c0_i32_0 : i32, i32, i32
  }
  func.func @transform_3(%arg0: i32, %arg1: i32) -> (i32, i32, i32, i32) {
    %c0_i32 = arith.constant 0 : i32
    %c0_i32_0 = arith.constant 0 : i32
    %c0_i32_1 = arith.constant 0 : i32
    return %arg1, %arg0, %c0_i32, %c0_i32_0 : i32, i32, i32, i32
  }
}

</mosaic_0001>

<llo_original>
// kernel: tpu_custom_call.1
$region0: #{tpu_custom_call.1}
  #allocation0 [shape = 'u32[]', space=smem, size = 0x4, offset = 0x4, fixed_abs, tag = 'smem constant byte address 0x4 - core index']
  #allocation1 [shape = 'u32[144,128]{1,0:T(1,128)}', space=vmem, size = 0x12000, scoped, tag = 'internal scratch']
  %s0 = inlined_call_operand.vmem [shape: f32[2,2,4,128], index: 0, kind: input, shape index: {}]
  %s1 = inlined_call_operand.vmem [shape: f32[2,4,1], index: 1, kind: input, shape index: {}]
  %s2 = inlined_call_operand.vmem [shape: f32[2,4,1], index: 2, kind: input, shape index: {}]
  %s3 = inlined_call_operand.hbm [shape: f32[2,2,4,128], index: 3, kind: output, shape index: {}]
  %s4 = sld [smem:[#allocation0]]
  $region86: #{tpu_custom_call.1} parent=0
    _
  %s6 = ssub.s32 1, %s4
  %s7 = scalar_select 0, %s6, %s4
  $region1: #{tpu_custom_call.1} parent=0
    #allocation2 [shape = 'u8[8192]{0}', space=vmem, size = 0x2000, scoped, tag = 'input window, operand 0']
    #allocation3 [shape = 'u8[8192]{0}', space=vmem, size = 0x2000, scoped, tag = 'output window, operand 0']
    #allocation4 [shape = 's32[2]{0}', space=sflag, size = 0x8, scoped, tag = 'scoped memory for tpu_custom_call.1']
    %8 = vsyncpa [#allocation4], 0
    %s9 = scalar_lea.sflag [#allocation4], 1
    %10 = vsyncpa %s9, 0
    loop: start=0, step=1, limit=4
    $region2: #{tpu_custom_call.1} parent=1 // loop_pre_header
      _
    $region3: #{tpu_custom_call.1} parent=1 // loop_header
      %s12 = sphi 0, %s16
      %p13 = scmp.ge.s32.totalorder %s12, 4
      %s19 = sphi 0, %s31
      %s20 = sphi 0, %s27
      %s21 = sphi 0, %s19
      %s22 = sphi 0, %s20
      %s23 = sphi 0, %s21
      %s24 = sphi 0, %s22
      %s36 = sphi 0, %s38
      %s39 = sphi 0, %s36
      %s40 = sphi 0, %s39
      %s56 = sphi 0, %s40
      %s62 = sphi 0, %s64
      %s65 = sphi 0, %s62
      %s66 = sphi 0, %s65
      %s82 = sphi 0, %s66
      %s88 = sphi 0, %s90
      %s91 = sphi 0, %s88
      %s92 = sphi 0, %s91
      %s108 = sphi 0, %s92
      %s116 = sphi 0, %s118
      %s119 = sphi 0, %s116
      %s120 = sphi 0, %s119
      %s136 = sphi 0, %s120
    $region4: #{tpu_custom_call.1} parent=1 // loop_header_branch
      %15 = sbr.rel (%p13) target = $region8
    $region5: #{tpu_custom_call.1} parent=1 // loop_body
      %s17 = ssub.s32 %s12, 1
      %s18 = ssub.s32 %s12, 2
      %s25 = sadd.s32 1, %s20
      %p26 = scmp.ge.s32.totalorder %s25, 1
      %s27 = scalar_select %p26, 0, %s25
      %s28 = sadd.s32 1, %s19
      %s29 = scalar_select %p26, %s28, %s19
      %p30 = scmp.ge.s32.totalorder %s29, 2
      %s31 = scalar_select %p30, 0, %s29
      %s32 = ssub.s32 %s20, %s27
      %s33 = ssub.s32 %s19, %s31
      %s34 = sor.u32 %s32, %s33
      %p35 = scmp.eq.s32.totalorder %s34, 0
      %s37 = sadd.s32 %s36, 1
      %s38 = scalar_select %p35, %s36, %s37
      %p41 = pneg %p35
      %p42 = scmp.eq.s32.totalorder %s12, 1
      %p43 = por %p41, %p42
      %p44 = scmp.ne.s32.totalorder %s36, %s39
      %p45 = scmp.eq.s32.totalorder %s12, 0
      %p46 = por %p44, %p45
      %p47 = scmp.ne.s32.totalorder %s36, %s39
      %p48 = scmp.eq.s32.totalorder %s17, 1
      %p49 = por %p47, %p48
      %p50 = scmp.ne.s32.totalorder %s39, %s40
      %p51 = scmp.eq.s32.totalorder %s17, 0
      %p52 = por %p50, %p51
      %p53 = scmp.ne.s32.totalorder %s39, %s40
      %p54 = scmp.eq.s32.totalorder %s18, 1
      %p55 = por %p53, %p54
      %p57 = scmp.ne.s32.totalorder %s40, %s56
      %p58 = scmp.eq.s32.totalorder %s18, 0
      %p59 = por %p57, %p58
      %s60 = ssub.s32 %s19, %s31
      %p61 = scmp.eq.s32.totalorder %s60, 0
      %s63 = sadd.s32 %s62, 1
      %s64 = scalar_select %p61, %s62, %s63
      %p67 = pneg %p61
      %p68 = scmp.eq.s32.totalorder %s12, 1
      %p69 = por %p67, %p68
      %p70 = scmp.ne.s32.totalorder %s62, %s65
      %p71 = scmp.eq.s32.totalorder %s12, 0
      %p72 = por %p70, %p71
      %p73 = scmp.ne.s32.totalorder %s62, %s65
      %p74 = scmp.eq.s32.totalorder %s17, 1
      %p75 = por %p73, %p74
      %p76 = scmp.ne.s32.totalorder %s65, %s66
      %p77 = scmp.eq.s32.totalorder %s17, 0
      %p78 = por %p76, %p77
      %p79 = scmp.ne.s32.totalorder %s65, %s66
      %p80 = scmp.eq.s32.totalorder %s18, 1
      %p81 = por %p79, %p80
      %p83 = scmp.ne.s32.totalorder %s66, %s82
      %p84 = scmp.eq.s32.totalorder %s18, 0
      %p85 = por %p83, %p84
      %s86 = ssub.s32 %s19, %s31
      %p87 = scmp.eq.s32.totalorder %s86, 0
      %s89 = sadd.s32 %s88, 1
      %s90 = scalar_select %p87, %s88, %s89
      %p93 = pneg %p87
      %p94 = scmp.eq.s32.totalorder %s12, 1
      %p95 = por %p93, %p94
      %p96 = scmp.ne.s32.totalorder %s88, %s91
      %p97 = scmp.eq.s32.totalorder %s12, 0
      %p98 = por %p96, %p97
      %p99 = scmp.ne.s32.totalorder %s88, %s91
      %p100 = scmp.eq.s32.totalorder %s17, 1
      %p101 = por %p99, %p100
      %p102 = scmp.ne.s32.totalorder %s91, %s92
      %p103 = scmp.eq.s32.totalorder %s17, 0
      %p104 = por %p102, %p103
      %p105 = scmp.ne.s32.totalorder %s91, %s92
      %p106 = scmp.eq.s32.totalorder %s18, 1
      %p107 = por %p105, %p106
      %p109 = scmp.ne.s32.totalorder %s92, %s108
      %p110 = scmp.eq.s32.totalorder %s18, 0
      %p111 = por %p109, %p110
      %s112 = ssub.s32 %s20, %s27
      %s113 = ssub.s32 %s19, %s31
      %s114 = sor.u32 %s112, %s113
      %p115 = scmp.eq.s32.totalorder %s114, 0
      %s117 = sadd.s32 %s116, 1
      %s118 = scalar_select %p115, %s116, %s117
      %p121 = pneg %p115
      %p122 = scmp.eq.s32.totalorder %s12, 1
      %p123 = por %p121, %p122
      %p124 = scmp.ne.s32.totalorder %s116, %s119
      %p125 = scmp.eq.s32.totalorder %s12, 0
      %p126 = por %p124, %p125
      %p127 = scmp.ne.s32.totalorder %s116, %s119
      %p128 = scmp.eq.s32.totalorder %s17, 1
      %p129 = por %p127, %p128
      %p130 = scmp.ne.s32.totalorder %s119, %s120
      %p131 = scmp.eq.s32.totalorder %s17, 0
      %p132 = por %p130, %p131
      %p133 = scmp.ne.s32.totalorder %s119, %s120
      %p134 = scmp.eq.s32.totalorder %s18, 1
      %p135 = por %p133, %p134
      %p137 = scmp.ne.s32.totalorder %s120, %s136
      %p138 = scmp.eq.s32.totalorder %s18, 0
      %p139 = por %p137, %p138
      %p140 = scmp.le.s32.totalorder 1, %s12
      %p141 = scmp.lt.s32.totalorder %s12, 3
      %p142 = pnand %p140, %p141
      %p143 = pneg %p142
      // Predicated region
      $region9: #{tpu_custom_call.1} parent=5 // pred_check
        _
      $region10: #{tpu_custom_call.1} parent=5 // pred_check_branch
        %145 = sbr.rel (%p142) target = $region12
      $region11: #{tpu_custom_call.1} parent=5 // pred_region
        %s146 = ssub.s32 %s12, 1
      $region12: #{tpu_custom_call.1} parent=5 // pred_fallthru
        _
      %p147 = scmp.lt.s32.totalorder %s12, 2
      // Predicated region
      $region13: #{tpu_custom_call.1} parent=5 // pred_check
        %p148 = pneg %p147
      $region14: #{tpu_custom_call.1} parent=5 // pred_check_branch
        %150 = sbr.rel (%p148) target = $region16
      $region15: #{tpu_custom_call.1} parent=5 // pred_region
        // Predicated region
        $region17: #{tpu_custom_call.1} parent=15 // pred_check
          %p151 = pneg %p46
        $region18: #{tpu_custom_call.1} parent=15 // pred_check_branch
          %153 = sbr.rel (%p151) target = $region20
        $region19: #{tpu_custom_call.1} parent=15 // pred_region
          %s154 = sand.u32 %s36, 1
          %s155 = sand.u32 %s36, 1
          %s156 = smul.addr %s155, 8
          %s157 = scalar_lea.vmem [#allocation2], %s156
          %s158 = smul.u32 2, %s20
          %s159 = smul.addr %s158, 2
          %s160 = sadd.s32 %s19, %s159
          %s161 = smul.addr %s160, 4
          %s162 = scalar_lea.vmem %s0, %s161
          // Predicated region
          $region21: #{tpu_custom_call.1} parent=19 // pred_check
            _
          $region22: #{tpu_custom_call.1} parent=19 // pred_check_branch
            %164 = sbr.rel (0) target = $region24
          $region23: #{tpu_custom_call.1} parent=19 // pred_region
            // Predicated region
            $region25: #{tpu_custom_call.1} parent=23 // pred_check
              _
            $region26: #{tpu_custom_call.1} parent=23 // pred_check_branch
              %166 = sbr.rel target = $region28
            $region27: #{tpu_custom_call.1} parent=23 // pred_region
              // Predicated region
              $region40: #{tpu_custom_call.1} parent=27 // pred_check
                _
              $region41: #{tpu_custom_call.1} parent=27 // pred_check_branch
                %183 = sbr.rel (0) target = $region43
              $region42: #{tpu_custom_call.1} parent=27 // pred_region
                loop: start=0, step=1, limit=1
                $region44: #{tpu_custom_call.1} parent=42 // loop_pre_header
                  _
                $region45: #{tpu_custom_call.1} parent=42 // loop_header
                  %s185 = sphi 0, %s189
                  %p186 = scmp.ge.s32.totalorder %s185, 1
                  %s190 = sphi %s162, %s162
                  %s191 = sphi %s157, %s157
                $region46: #{tpu_custom_call.1} parent=42 // loop_header_branch
                  %188 = sbr.rel (%p186) target = $region50
                $region47: #{tpu_custom_call.1} parent=42 // loop_body
                  _
                $region48: #{tpu_custom_call.1} parent=42 // loop_footer
                  %s189 = sadd.s32 1, %s185
                $region49: #{tpu_custom_call.1} parent=42 // loop_footer_branch
                  %184 = sbr.rel target = $region45
                $region50: #{tpu_custom_call.1} parent=42 // loop_exit
                  _
                loop: start=0, step=1, limit=1
                $region51: #{tpu_custom_call.1} parent=42 // loop_pre_header
                  _
                $region52: #{tpu_custom_call.1} parent=42 // loop_header
                  %s194 = sphi 0, %s198
                  %p195 = scmp.ge.s32.totalorder %s194, 1
                  %s199 = sphi %s162, %s162
                  %s200 = sphi %s157, %s157
                $region53: #{tpu_custom_call.1} parent=42 // loop_header_branch
                  %197 = sbr.rel (%p195) target = $region57
                $region54: #{tpu_custom_call.1} parent=42 // loop_body
                  %v201 = vld [vmem:[%s199] sm:$0xf]
                  %202 = vst [vmem:[%s200] sm:$0xf] %v201
                  %v203 = vld [vmem:[%s199 + $0x8] sm:$0xf]
                  %204 = vst [vmem:[%s200 + $0x4] sm:$0xf] %v203
                $region55: #{tpu_custom_call.1} parent=42 // loop_footer
                  %s198 = sadd.s32 1, %s194
                $region56: #{tpu_custom_call.1} parent=42 // loop_footer_branch
                  %193 = sbr.rel target = $region52
                $region57: #{tpu_custom_call.1} parent=42 // loop_exit
                  _
              $region43: #{tpu_custom_call.1} parent=27 // pred_fallthru
                _
            $region28: #{tpu_custom_call.1} parent=23 // pred_fallthru
              _
            // Predicated region
            $region29: #{tpu_custom_call.1} parent=23 // pred_check
              _
            $region30: #{tpu_custom_call.1} parent=23 // pred_check_branch
              %168 = sbr.rel (0) target = $region32
            $region31: #{tpu_custom_call.1} parent=23 // pred_region
              loop: start=0, step=1, limit=1
              $region33: #{tpu_custom_call.1} parent=31 // loop_pre_header
                _
              $region34: #{tpu_custom_call.1} parent=31 // loop_header
                %s171 = sphi 0, %s175
                %p172 = scmp.ge.s32.totalorder %s171, 1
                %s176 = sphi %s162, %s162
                %s177 = sphi %s157, %s157
              $region35: #{tpu_custom_call.1} parent=31 // loop_header_branch
                %174 = sbr.rel (%p172) target = $region39
              $region36: #{tpu_custom_call.1} parent=31 // loop_body
                %v178 = vld [vmem:[%s176] sm:$0xf]
                %179 = vst [vmem:[%s177] sm:$0xf] %v178
                %v180 = vld [vmem:[%s176 + $0x8] sm:$0xf]
                %181 = vst [vmem:[%s177 + $0x4] sm:$0xf] %v180
              $region37: #{tpu_custom_call.1} parent=31 // loop_footer
                %s175 = sadd.s32 1, %s171
              $region38: #{tpu_custom_call.1} parent=31 // loop_footer_branch
                %170 = sbr.rel target = $region34
              $region39: #{tpu_custom_call.1} parent=31 // loop_exit
                _
            $region32: #{tpu_custom_call.1} parent=23 // pred_fallthru
              _
          $region24: #{tpu_custom_call.1} parent=19 // pred_fallthru
            _
          %205 = vnop
        $region20: #{tpu_custom_call.1} parent=15 // pred_fallthru
          _
        // Predicated region
        $region58: #{tpu_custom_call.1} parent=15 // pred_check
          %p206 = pneg %p72
        $region59: #{tpu_custom_call.1} parent=15 // pred_check_branch
          %208 = sbr.rel (%p206) target = $region61
        $region60: #{tpu_custom_call.1} parent=15 // pred_region
          %p209 = scmp.lt.s32.totalorder %s19, 1
          %s210 = scalar_select %p209, %s19, 1
          %s211 = smul.addr %s210, 4
          %s212 = scalar_lea.vmem %s1, %s211
        $region61: #{tpu_custom_call.1} parent=15 // pred_fallthru
          _
        // Predicated region
        $region62: #{tpu_custom_call.1} parent=15 // pred_check
          %p213 = pneg %p98
        $region63: #{tpu_custom_call.1} parent=15 // pred_check_branch
          %215 = sbr.rel (%p213) target = $region65
        $region64: #{tpu_custom_call.1} parent=15 // pred_region
          %p216 = scmp.lt.s32.totalorder %s19, 1
          %s217 = scalar_select %p216, %s19, 1
          %s218 = smul.addr %s217, 4
          %s219 = scalar_lea.vmem %s2, %s218
        $region65: #{tpu_custom_call.1} parent=15 // pred_fallthru
          _
      $region16: #{tpu_custom_call.1} parent=5 // pred_fallthru
        _
      %p220 = scmp.le.s32.totalorder 1, %s12
      %p221 = scmp.lt.s32.totalorder %s12, 3
      %p222 = pnand %p220, %p221
      %p223 = pneg %p222
      // Predicated region
      $region66: #{tpu_custom_call.1} parent=5 // pred_check
        _
      $region67: #{tpu_custom_call.1} parent=5 // pred_check_branch
        %225 = sbr.rel (%p222) target = $region69
      $region68: #{tpu_custom_call.1} parent=5 // pred_region
        %s226 = ssub.s32 %s12, 1
        %s227 = sand.u32 %s39, 1
        %s228 = sand.u32 %s39, 1
        %s229 = smul.addr %s228, 8
        %s230 = scalar_lea.vmem [#allocation2], %s229
        // Predicated region
        $region70: #{tpu_custom_call.1} parent=68 // pred_check
          %p231 = pneg %p52
        $region71: #{tpu_custom_call.1} parent=68 // pred_check_branch
          %233 = sbr.rel (%p231) target = $region73
        $region72: #{tpu_custom_call.1} parent=68 // pred_region
          _
        $region73: #{tpu_custom_call.1} parent=68 // pred_fallthru
          _
        %s234 = sand.u32 %s39, 1
        %s235 = sand.u32 %s39, 1
        %s236 = smul.addr %s235, 8
        %s237 = scalar_lea.vmem [#allocation2], %s236
        %p238 = pneg %p52
        %p239 = pneg %p49
        %p240 = scmp.lt.s32.totalorder %s21, 1
        %s241 = scalar_select %p240, %s21, 1
        %s242 = smul.addr %s241, 4
        %s243 = scalar_lea.vmem %s1, %s242
        %p244 = pneg %p78
        %p245 = pneg %p75
        %p246 = scmp.lt.s32.totalorder %s21, 1
        %s247 = scalar_select %p246, %s21, 1
        %s248 = smul.addr %s247, 4
        %s249 = scalar_lea.vmem %s2, %s248
        %p250 = pneg %p104
        %p251 = pneg %p101
        %p252 = pneg %p132
        %p253 = pneg %p129
        %s254 = sand.u32 %s119, 1
        %s255 = scalar_lea.sflag [#allocation4], %s254
        %s256 = sand.u32 %s119, 1
        %s257 = smul.addr %s256, 8
        %s258 = scalar_lea.vmem [#allocation3], %s257
        %s259 = smul.u32 2, %s22
        %p260 = scmp.lt.s32.totalorder %s21, 1
        %s261 = scalar_select %p260, %s21, 1
        %s262 = smul.addr %s261, 4
        %s263 = scalar_lea.vmem %s1, %s262
        %p264 = scmp.lt.s32.totalorder %s21, 1
        %s265 = scalar_select %p264, %s21, 1
        %s266 = smul.addr %s265, 4
        %s267 = scalar_lea.vmem %s2, %s266
        %s268 = smul.u32 2, %s22
        %v269 = vld [vmem:[%s230] sm:$0xf]
        %v270 = vld [vmem:[%s230 + $0x4] sm:$0xf]
        %vm271 = vcmask 1043456
        %v272 = vsel %vm271, %v269, 0.0
        %273 = vadd.xlane.f32.xlu0 %v272
        %v274 = vpop.xlane.xlu0 %273
        %v275 = vsel %vm271, %v270, 0.0
        %276 = vadd.xlane.f32.xlu0 %v275
        %v277 = vpop.xlane.xlu0 %276
        %v278 = vsel %vm271, %v274, 0.0
        %v279 = vrot.slane %v278, 4
        %v280 = vadd.f32 %v278, %v279
        %v281 = vrot.slane %v280, 2
        %v282 = vadd.f32 %v280, %v281
        %v283 = vrot.slane %v282, 1
        %v284 = vadd.f32 %v282, %v283
        %v285 = vsel %vm271, %v277, 0.0
        %v286 = vrot.slane %v285, 4
        %v287 = vadd.f32 %v285, %v286
        %v288 = vrot.slane %v287, 2
        %v289 = vadd.f32 %v287, %v288
        %v290 = vrot.slane %v289, 1
        %v291 = vadd.f32 %v289, %v290
        %v292 = vmul.f32 %v284, 0.001953125
        %v293 = vmul.f32 %v291, 0.001953125
        %v294 = vsub.f32 %v269, %v292
        %v295 = vsub.f32 %v270, %v293
        %v296 = vmul.f32 %v294, %v294
        %v297 = vmul.f32 %v295, %v295
        %v298 = vsel %vm271, %v296, 0.0
        %299 = vadd.xlane.f32.xlu0 %v298
        %v300 = vpop.xlane.xlu0 %299
        %v301 = vsel %vm271, %v297, 0.0
        %302 = vadd.xlane.f32.xlu0 %v301
        %v303 = vpop.xlane.xlu0 %302
        %v304 = vsel %vm271, %v300, 0.0
        %v305 = vrot.slane %v304, 4
        %v306 = vadd.f32 %v304, %v305
        %v307 = vrot.slane %v306, 2
        %v308 = vadd.f32 %v306, %v307
        %v309 = vrot.slane %v308, 1
        %v310 = vadd.f32 %v308, %v309
        %v311 = vsel %vm271, %v303, 0.0
        %v312 = vrot.slane %v311, 4
        %v313 = vadd.f32 %v311, %v312
        %v314 = vrot.slane %v313, 2
        %v315 = vadd.f32 %v313, %v314
        %v316 = vrot.slane %v315, 1
        %v317 = vadd.f32 %v315, %v316
        %v318 = vmul.f32 %v310, 0.001953125
        %v319 = vmul.f32 %v317, 0.001953125
        %v320 = vadd.f32 %v318, 1e-05
        %v321 = vadd.f32 %v319, 1e-05
        %v322 = vrsqrt.pop %v320
        %v323 = vrsqrt.pop %v321
        %v324 = vld [vmem:[%s263] sm:$0xf]
        %v325 = vld [vmem:[%s267] sm:$0xf]
        %v326 = vmul.f32 %v324, %v322
        %v327 = vmul.f32 %v324, %v323
        %329 = vset.pattern.permute.xlu0 0
        %330 = vperm.xlu0 %329, %v326
        %v331 = vpop.permute.xlu0 %330
        %334 = vset.pattern.permute.xlu0 0
        %335 = vperm.xlu0 %334, %v327
        %v336 = vpop.permute.xlu0 %335
        %v338 = vmul.f32 %v294, %v331
        %v339 = vmul.f32 %v295, %v336
        %341 = vset.pattern.permute.xlu0 0
        %342 = vperm.xlu0 %341, %v325
        %v343 = vpop.permute.xlu0 %342
        %v345 = vadd.f32 %v338, %v343
        %v346 = vadd.f32 %v339, %v343
        %347 = vst [vmem:[%s258] sm:$0xf] %v345
        %348 = vst [vmem:[%s258 + $0x4] sm:$0xf] %v346
        %s349 = sand.u32 %s119, 1
        %s350 = scalar_lea.sflag [#allocation4], %s349
        %s351 = sand.u32 %s119, 1
        %s352 = smul.addr %s351, 8
        %s353 = scalar_lea.vmem [#allocation3], %s352
        // Predicated region
        $region74: #{tpu_custom_call.1} parent=68 // pred_check
          %p354 = pneg %p129
        $region75: #{tpu_custom_call.1} parent=68 // pred_check_branch
          %356 = sbr.rel (%p354) target = $region77
        $region76: #{tpu_custom_call.1} parent=68 // pred_region
          %s357 = smul.u32 2, %s22
          %s359 = ssub.s32 128, 128
          %360 = vsyncadd %s350, %s359
          %s361 = smul.addr %s357, 2
          %s362 = sadd.s32 %s21, %s361
          %s363 = smul.addr %s362, 64
          %s364 = scalar_lea.hbm %s3, %s363
          %s365 = sshll.u32 %s353, 4
          %s366 = int_to_ptr.vmem [resolvable:$true] %s365
          %371 = dma.vmem_to_hbm [thread:$0]  %s366, 128, %s364, %s350, 64, 128, 4
        $region77: #{tpu_custom_call.1} parent=68 // pred_fallthru
          _
      $region69: #{tpu_custom_call.1} parent=5 // pred_fallthru
        _
      %p372 = scmp.le.s32.totalorder 2, %s12
      // Predicated region
      $region78: #{tpu_custom_call.1} parent=5 // pred_check
        %p373 = pneg %p372
      $region79: #{tpu_custom_call.1} parent=5 // pred_check_branch
        %375 = sbr.rel (%p373) target = $region81
      $region80: #{tpu_custom_call.1} parent=5 // pred_region
        %s376 = ssub.s32 %s12, 2
        // Predicated region
        $region82: #{tpu_custom_call.1} parent=80 // pred_check
          %p377 = pneg %p135
        $region83: #{tpu_custom_call.1} parent=80 // pred_check_branch
          %379 = sbr.rel (%p377) target = $region85
        $region84: #{tpu_custom_call.1} parent=80 // pred_region
          %s380 = sand.u32 %s120, 1
          %s381 = scalar_lea.sflag [#allocation4], %s380
          %s382 = sand.u32 %s120, 1
          %s383 = smul.addr %s382, 8
          %s384 = scalar_lea.vmem [#allocation3], %s383
          %385 = dma.done %s381, 128
        $region85: #{tpu_custom_call.1} parent=80 // pred_fallthru
          _
      $region81: #{tpu_custom_call.1} parent=5 // pred_fallthru
        _
    $region6: #{tpu_custom_call.1} parent=1 // loop_footer
      %s16 = sadd.s32 1, %s12
    $region7: #{tpu_custom_call.1} parent=1 // loop_footer_branch
      %11 = sbr.rel target = $region3
    $region8: #{tpu_custom_call.1} parent=1 // loop_exit
      _
    %386 = vsyncpa [#allocation4], 1
    %s387 = scalar_lea.sflag [#allocation4], 1
    %388 = vsyncpa %s387, 1

</llo_original>
